<compile_context>
chip_gen: v5e
topology: v5e:2x2
jax: 0.10.0
libtpu: 0.0.40
codegen_flags: <defaults>
</compile_context>

<pallas_src>
import functools

import jax
import jax.numpy as jnp
from jax.experimental import pallas as pl
from jax.experimental.pallas import tpu as pltpu


def _coor_attention_kernel(x_ref, e_ref, w1_ref, b1_ref, wh_ref, bh_ref,
                           ww_ref, bw_ref, o_ref, ah_ref, aw_ref, *, h_size):
    """One grid step processes Bt images.

    x_ref / o_ref : (Bt*C, H*W)   lane-dense, sublane-dense spatial layout
    e_ref         : (H+W, H*W)    shared 0/1 pooling / expansion matrix
    w1/b1         : (M, C), (M,1) conv1 with eval-mode BN folded in
    wh/bh, ww/bw  : (Co, M), (Co,1)
    ah_ref/aw_ref : (Bt*Co, H+W)  VMEM scratch holding the stacked attention
                                  logits for the single expansion matmuls
    """
    f32 = jnp.float32
    rows = x_ref.shape[0]                      # Bt * C
    hpw = e_ref.shape[0]                       # H + W
    m, c = w1_ref.shape
    co = wh_ref.shape[0]
    bt = rows // c
    h = h_size
    w = hpw - h_size

    xb = x_ref[...]                            # (Bt*C, HW)
    e = e_ref[...]                             # (H+W, HW)

    # Column bookkeeping over the concatenated (H | W) axis.
    pos = jax.lax.broadcasted_iota(jnp.int32, (1, hpw), 1)
    is_h = pos < h
    scale = jnp.where(is_h, 1.0 / w, 1.0 / h).astype(f32)   # mean over W | mean over H
    mask_h = is_h.astype(f32)                                # keep the x_h half
    mask_w = 1.0 - mask_h                                    # keep the x_w half

    # ---- coordinate pooling: ONE matmul over the whole block (x @ E^T) ----
    # columns [0:H) = mean over W, columns [H:H+W) = mean over H, exactly
    # torch.cat((x_h, x_w.permute(...)), dim=2).
    pooled = jax.lax.dot_general(
        xb, e, (((1,), (1,)), ((), ())),
        preferred_element_type=f32) * scale                  # (Bt*C, H+W)

    # Hoisted bias broadcasts (JAX does not CSE broadcast_in_dim in the loop).
    b1 = jnp.broadcast_to(b1_ref[...], (m, hpw))
    bh = jnp.broadcast_to(bh_ref[...], (co, hpw))
    bw = jnp.broadcast_to(bw_ref[...], (co, hpw))
    w1 = w1_ref[...]
    wh = wh_ref[...]
    ww = ww_ref[...]

    # ---- tiny per-image channel mixing: conv1(+BN) -> h_swish -> conv_h/w ----
    # Touches only (C + 2*Co) x (H+W) elements per image; Bt is capped in the
    # wrapper so this static unroll stays small and bounded.
    for b in range(bt):
        p = pooled[b * c:(b + 1) * c, :]                            # (C, H+W)
        y = jnp.dot(w1, p, preferred_element_type=f32) + b1         # (M, H+W)
        y = y * (jnp.clip(y + 3.0, 0.0, 6.0) * (1.0 / 6.0))         # h_swish
        ah = jax.nn.sigmoid(jnp.dot(wh, y, preferred_element_type=f32) + bh)
        aw = jax.nn.sigmoid(jnp.dot(ww, y, preferred_element_type=f32) + bw)
        ah_ref[b * co:(b + 1) * co, :] = ah * mask_h                # (Co, H+W)
        aw_ref[b * co:(b + 1) * co, :] = aw * mask_w

    # ---- broadcast back to (Bt*Co, HW) with ONE matmul per path, apply -----
    att_h = jnp.dot(ah_ref[...], e, preferred_element_type=f32)     # (Bt*Co, HW)
    att_w = jnp.dot(aw_ref[...], e, preferred_element_type=f32)
    o_ref[...] = (xb * att_h * att_w).astype(o_ref.dtype)


def _num_tensorcores():
    """2 TensorCores per device on v7x (and v4/v5p megacore); 1 on v5e/v6e."""
    try:
        kind = jax.devices()[0].device_kind.lower()
    except Exception:
        return 1
    return 2 if any(t in kind for t in ("v7", "7x", "v4", "v5p")) else 1


def _choose_bt(batch, channels, hw, itemsize, target_block_bytes, max_unroll,
               num_tc):
    """Images per grid step.

    Constraints: Bt divides B; Bt*C is a multiple of 8 (or the full dim) so the
    2-D block is sublane-aligned; Bt <= max_unroll bounds the in-kernel loop.
    Preference: biggest block under the byte target; on 2-TC chips prefer a
    grid extent that is a multiple of the core count.
    """
    per_image = channels * hw * itemsize
    valid = []
    for bt in range(1, batch + 1):
        if batch % bt:
            continue
        rows = bt * channels
        if rows % 8 != 0 and rows != batch * channels:
            continue
        if bt > max_unroll:
            continue
        valid.append(bt)
    if not valid:
        return batch                      # single full-batch block (grid of 1)
    fits = [bt for bt in valid if bt * per_image <= target_block_bytes] or valid[:1]
    if num_tc > 1:
        balanced = [bt for bt in fits if (batch // bt) % num_tc == 0]
        if balanced:
            fits = balanced
    return max(fits)


def coor_attention(x, params, *, target_block_bytes=2 << 20,
                   max_images_per_step=8):
    """x: (B, C, H, W) float32.  params: dict of CoorAttention weights."""
    B, C, H, W = x.shape
    M, Cin = params["w1"].shape
    Co = params["wh"].shape[0]
    assert Cin == C, "conv1 in_channels must match x channels"
    assert Co == C, "out_channels must equal in_channels for identity * att_h * att_w"
    HW, HpW = H * W, H + W
    f32 = jnp.float32

    # ---- fold eval-mode BatchNorm into conv1 -------------------------------
    # TODO(synk): training-mode BatchNorm (batch statistics) is not reproduced.
    w1_eff = (params["bn_scale"] * params["w1"]).astype(f32)               # (M, C)
    b1_eff = (params["bn_scale"] * params["b1"] + params["bn_shift"]).astype(f32)

    # ---- single shared 0/1 pooling / expansion matrix E --------------------
    # E[p, l] = 1 if (p < H and l//W == p) or (p >= H and l%W == p-H)
    lin = jnp.arange(HW)
    h_idx = (lin // W)[None, :]
    w_idx = (lin % W)[None, :]
    p = jnp.arange(HpW)[:, None]
    E = jnp.where(p < H, h_idx == p, w_idx == (p - H)).astype(f32)         # (H+W, HW)

    # ---- lane/sublane-dense layout + batch tiling ---------------------------
    x2 = x.reshape(B * C, HW).astype(f32)
    num_tc = _num_tensorcores()
    Bt = _choose_bt(B, C, HW, x2.dtype.itemsize, target_block_bytes,
                    max_images_per_step, num_tc)
    R = Bt * C
    grid = (B // Bt,)

    # ---- VMEM budget from the real footprint --------------------------------
    block_bytes = R * HW * 4
    const_bytes = (HpW * HW + M * C + M + 2 * Co * M + 2 * Co) * 4
    scratch_bytes = 2 * Bt * Co * HpW * 4
    footprint = (4 * block_bytes          # x & o blocks, double-buffered
                 + const_bytes            # single-buffered constants
                 + scratch_bytes
                 + 3 * block_bytes        # in-kernel intermediates (att_h/att_w/..)
                 + (2 << 20))             # slack
    vmem_limit = int(min(max(footprint, 16 << 20), 48 << 20))

    def const_spec(shape):
        nd = len(shape)
        return pl.BlockSpec(shape, lambda g: (0,) * nd,
                            pipeline_mode=pl.Buffered(1))

    kernel = functools.partial(_coor_attention_kernel, h_size=H)

    out = pl.pallas_call(
        kernel,
        out_shape=jax.ShapeDtypeStruct((B * C, HW), f32),
        grid_spec=pltpu.PrefetchScalarGridSpec(
            num_scalar_prefetch=0,
            grid=grid,
            in_specs=[
                pl.BlockSpec((R, HW), lambda g: (g, 0)),   # x block
                const_spec((HpW, HW)),                     # E
                const_spec((M, C)),                        # w1 (BN folded)
                const_spec((M, 1)),                        # b1 (BN folded)
                const_spec((Co, M)),                       # wh
                const_spec((Co, 1)),                       # bh
                const_spec((Co, M)),                       # ww
                const_spec((Co, 1)),                       # bw
            ],
            out_specs=pl.BlockSpec((R, HW), lambda g: (g, 0)),
            scratch_shapes=[pltpu.VMEM((Bt * Co, HpW), f32),
                            pltpu.VMEM((Bt * Co, HpW), f32)],
        ),
        compiler_params=pltpu.CompilerParams(
            dimension_semantics=("parallel",),
            vmem_limit_bytes=vmem_limit),
    )(x2, E, w1_eff, b1_eff,
      params["wh"], params["bh"], params["ww"], params["bw"])

    return out.reshape(B, C, H, W)


def make_params(in_channels, out_channels, reduction=32, seed=1):
    """Deterministic synthetic parameters matching CoorAttention.__init__."""
    middle = max(8, in_channels // reduction)
    keys = jax.random.split(jax.random.PRNGKey(seed), 10)
    f32 = jnp.float32

    w1 = 0.5 * jax.random.normal(keys[0], (middle, in_channels), f32)
    b1 = 0.1 * jax.random.normal(keys[1], (middle, 1), f32)

    gamma = 1.0 + 0.1 * jax.random.normal(keys[2], (middle, 1), f32)
    beta = 0.1 * jax.random.normal(keys[3], (middle, 1), f32)
    run_mean = 0.05 * jax.random.normal(keys[4], (middle, 1), f32)
    run_var = jnp.abs(1.0 + 0.1 * jax.random.normal(keys[5], (middle, 1), f32))
    eps = 1e-5
    bn_scale = gamma / jnp.sqrt(run_var + eps)
    bn_shift = beta - run_mean * bn_scale

    wh = 0.5 * jax.random.normal(keys[6], (out_channels, middle), f32)
    bh = 0.1 * jax.random.normal(keys[7], (out_channels, 1), f32)
    ww = 0.5 * jax.random.normal(keys[8], (out_channels, middle), f32)
    bw = 0.1 * jax.random.normal(keys[9], (out_channels, 1), f32)

    return dict(w1=w1, b1=b1, bn_scale=bn_scale, bn_shift=bn_shift,
                wh=wh, bh=bh, ww=ww, bw=bw)


def coor_attention_ref(x, p):
    """Pure-JAX reference mirroring the PyTorch forward (eval-mode BN)."""
    B, C, H, W = x.shape
    x_h = jnp.mean(x, axis=3)                       # (B, C, H)
    x_w = jnp.mean(x, axis=2)                       # (B, C, W)
    y = jnp.concatenate([x_h, x_w], axis=2)         # (B, C, H+W)
    y = jnp.einsum("mc,bcl->bml", p["w1"], y) + p["b1"][None]
    y = y * p["bn_scale"][None] + p["bn_shift"][None]
    y = y * (jnp.clip(y + 3.0, 0.0, 6.0) / 6.0)
    yh, yw = y[:, :, :H], y[:, :, H:]
    ah = jax.nn.sigmoid(jnp.einsum("om,bml->bol", p["wh"], yh) + p["bh"][None])
    aw = jax.nn.sigmoid(jnp.einsum("om,bml->bol", p["ww"], yw) + p["bw"][None])
    return x * ah[:, :, :, None] * aw[:, :, None, :]


if __name__ == "__main__":
    B, C, H, W = 2, 4, 16, 16
    out_channels = C  # must match C for the final broadcast multiply

    x = jax.random.normal(jax.random.PRNGKey(0), (B, C, H, W), jnp.float32)
    params = make_params(C, out_channels)

    out = coor_attention(x, params)
    out = jax.block_until_ready(out)

    ref = coor_attention_ref(x, params)
    assert out.shape == (B, C, H, W)
    assert jnp.allclose(out, ref, atol=3e-5, rtol=3e-5), "mismatch vs reference"

    print("KERNEL_OK")
</pallas_src>

<mosaic_0001>
module attributes {stable_mosaic.version = 11 : i64} {
  func.func @_coor_attention_kernel(%arg0: i32, %arg1: memref<8x256xf32, #tpu.memory_space<vmem>>, %arg2: memref<32x256xf32, #tpu.memory_space<vmem>>, %arg3: memref<8x4xf32, #tpu.memory_space<vmem>>, %arg4: memref<8x1xf32, #tpu.memory_space<vmem>>, %arg5: memref<4x8xf32, #tpu.memory_space<vmem>>, %arg6: memref<4x1xf32, #tpu.memory_space<vmem>>, %arg7: memref<4x8xf32, #tpu.memory_space<vmem>>, %arg8: memref<4x1xf32, #tpu.memory_space<vmem>>, %arg9: memref<8x256xf32, #tpu.memory_space<vmem>>, %arg10: memref<8x32xf32, #tpu.memory_space<vmem>>, %arg11: memref<8x32xf32, #tpu.memory_space<vmem>>) attributes {dimension_semantics = [#tpu.dimension_semantics<parallel>], iteration_bounds = array<i64: 1>, scalar_prefetch = 0 : i64, scratch_operands = 2 : i64, tpu.core_type = #tpu.core_type<tc>, window_params = [{transform_indices = @transform_0, window_bounds = array<i64: 8, 256>}, {pipeline_mode = #tpu.pipeline_mode<synchronous>, transform_indices = @transform_1, window_bounds = array<i64: 32, 256>}, {pipeline_mode = #tpu.pipeline_mode<synchronous>, transform_indices = @transform_2, window_bounds = array<i64: 8, 4>}, {pipeline_mode = #tpu.pipeline_mode<synchronous>, transform_indices = @transform_3, window_bounds = array<i64: 8, 1>}, {pipeline_mode = #tpu.pipeline_mode<synchronous>, transform_indices = @transform_4, window_bounds = array<i64: 4, 8>}, {pipeline_mode = #tpu.pipeline_mode<synchronous>, transform_indices = @transform_5, window_bounds = array<i64: 4, 1>}, {pipeline_mode = #tpu.pipeline_mode<synchronous>, transform_indices = @transform_6, window_bounds = array<i64: 4, 8>}, {pipeline_mode = #tpu.pipeline_mode<synchronous>, transform_indices = @transform_7, window_bounds = array<i64: 4, 1>}, {transform_indices = @transform_8, window_bounds = array<i64: 8, 256>}]} {
    %c0 = arith.constant 0 : index
    %c0_0 = arith.constant 0 : index
    %0 = vector.load %arg1[%c0, %c0_0] : memref<8x256xf32, #tpu.memory_space<vmem>>, vector<8x256xf32>
    %c0_1 = arith.constant 0 : index
    %c0_2 = arith.constant 0 : index
    %1 = vector.load %arg2[%c0_1, %c0_2] : memref<32x256xf32, #tpu.memory_space<vmem>>, vector<32x256xf32>
    %2 = tpu.iota {dimensions = array<i32: 1>} : vector<1x32xi32>
    %c16_i32 = arith.constant 16 : i32
    %3 = vector.broadcast %c16_i32 : i32 to vector<1x32xi32>
    %4 = arith.cmpi slt, %2, %3 : vector<1x32xi32>
    %cst = arith.constant 6.250000e-02 : f32
    %cst_3 = arith.constant 6.250000e-02 : f32
    %5 = vector.broadcast %cst : f32 to vector<1x32xf32>
    %6 = vector.broadcast %cst_3 : f32 to vector<1x32xf32>
    %7 = arith.select %4, %5, %6 : vector<1x32xi1>, vector<1x32xf32>
    %8 = arith.extui %4 : vector<1x32xi1> to vector<1x32xi32>
    %9 = arith.sitofp %8 : vector<1x32xi32> to vector<1x32xf32>
    %cst_4 = arith.constant 1.000000e+00 : f32
    %10 = vector.broadcast %cst_4 : f32 to vector<1x32xf32>
    %11 = arith.subf %10, %9 : vector<1x32xf32>
    %cst_5 = arith.constant dense<0.000000e+00> : vector<8x32xf32>
    %12 = tpu.matmul %0, %1, %cst_5 {dimension_numbers = #tpu.dot_dimension_numbers<[1], [1], [0], [0], [0, 0, 1, 0], [], []>} : vector<8x256xf32>, vector<32x256xf32>, vector<8x32xf32> -> vector<8x32xf32>
    %13 = vector.broadcast %7 : vector<1x32xf32> to vector<8x32xf32>
    %14 = arith.mulf %12, %13 : vector<8x32xf32>
    %c0_6 = arith.constant 0 : index
    %c0_7 = arith.constant 0 : index
    %15 = vector.load %arg4[%c0_6, %c0_7] : memref<8x1xf32, #tpu.memory_space<vmem>>, vector<8x1xf32>
    %16 = vector.shape_cast %15 : vector<8x1xf32> to vector<8x1xf32>
    %17 = vector.broadcast %16 : vector<8x1xf32> to vector<8x32xf32>
    %c0_8 = arith.constant 0 : index
    %c0_9 = arith.constant 0 : index
    %18 = vector.load %arg6[%c0_8, %c0_9] : memref<4x1xf32, #tpu.memory_space<vmem>>, vector<4x1xf32>
    %19 = vector.shape_cast %18 : vector<4x1xf32> to vector<4x1xf32>
    %20 = vector.broadcast %19 : vector<4x1xf32> to vector<4x32xf32>
    %c0_10 = arith.constant 0 : index
    %c0_11 = arith.constant 0 : index
    %21 = vector.load %arg8[%c0_10, %c0_11] : memref<4x1xf32, #tpu.memory_space<vmem>>, vector<4x1xf32>
    %22 = vector.shape_cast %21 : vector<4x1xf32> to vector<4x1xf32>
    %23 = vector.broadcast %22 : vector<4x1xf32> to vector<4x32xf32>
    %c0_12 = arith.constant 0 : index
    %c0_13 = arith.constant 0 : index
    %24 = vector.load %arg3[%c0_12, %c0_13] : memref<8x4xf32, #tpu.memory_space<vmem>>, vector<8x4xf32>
    %c0_14 = arith.constant 0 : index
    %c0_15 = arith.constant 0 : index
    %25 = vector.load %arg5[%c0_14, %c0_15] : memref<4x8xf32, #tpu.memory_space<vmem>>, vector<4x8xf32>
    %c0_16 = arith.constant 0 : index
    %c0_17 = arith.constant 0 : index
    %26 = vector.load %arg7[%c0_16, %c0_17] : memref<4x8xf32, #tpu.memory_space<vmem>>, vector<4x8xf32>
    %27 = vector.extract_strided_slice %14 {offsets = [0, 0], sizes = [4, 32], strides = [1, 1]} : vector<8x32xf32> to vector<4x32xf32>
    %cst_18 = arith.constant dense<0.000000e+00> : vector<8x32xf32>
    %28 = tpu.matmul %24, %27, %cst_18 {dimension_numbers = #tpu.dot_dimension_numbers<[1], [0], [0], [1], [0, 0, 1, 1], [], []>} : vector<8x4xf32>, vector<4x32xf32>, vector<8x32xf32> -> vector<8x32xf32>
    %29 = arith.addf %28, %17 : vector<8x32xf32>
    %cst_19 = arith.constant 3.000000e+00 : f32
    %30 = vector.broadcast %cst_19 : f32 to vector<8x32xf32>
    %31 = arith.addf %29, %30 : vector<8x32xf32>
    %cst_20 = arith.constant 0.000000e+00 : f32
    %cst_21 = arith.constant 6.000000e+00 : f32
    %32 = vector.broadcast %cst_20 : f32 to vector<8x32xf32>
    %33 = arith.maximumf %32, %31 : vector<8x32xf32>
    %34 = vector.broadcast %cst_21 : f32 to vector<8x32xf32>
    %35 = arith.minimumf %34, %33 : vector<8x32xf32>
    %cst_22 = arith.constant 0.166666672 : f32
    %36 = vector.broadcast %cst_22 : f32 to vector<8x32xf32>
    %37 = arith.mulf %35, %36 : vector<8x32xf32>
    %38 = arith.mulf %29, %37 : vector<8x32xf32>
    %cst_23 = arith.constant dense<0.000000e+00> : vector<4x32xf32>
    %39 = tpu.matmul %25, %38, %cst_23 {dimension_numbers = #tpu.dot_dimension_numbers<[1], [0], [0], [1], [0, 0, 1, 1], [], []>} : vector<4x8xf32>, vector<8x32xf32>, vector<4x32xf32> -> vector<4x32xf32>
    %40 = arith.addf %39, %20 : vector<4x32xf32>
    %41 = arith.negf %40 : vector<4x32xf32>
    %42 = math.exp %41 : vector<4x32xf32>
    %cst_24 = arith.constant 1.000000e+00 : f32
    %43 = vector.broadcast %cst_24 : f32 to vector<4x32xf32>
    %44 = arith.addf %43, %42 : vector<4x32xf32>
    %45 = arith.divf %43, %44 : vector<4x32xf32>
    %cst_25 = arith.constant dense<0.000000e+00> : vector<4x32xf32>
    %46 = tpu.matmul %26, %38, %cst_25 {dimension_numbers = #tpu.dot_dimension_numbers<[1], [0], [0], [1], [0, 0, 1, 1], [], []>} : vector<4x8xf32>, vector<8x32xf32>, vector<4x32xf32> -> vector<4x32xf32>
    %47 = arith.addf %46, %23 : vector<4x32xf32>
    %48 = arith.negf %47 : vector<4x32xf32>
    %49 = math.exp %48 : vector<4x32xf32>
    %cst_26 = arith.constant 1.000000e+00 : f32
    %50 = vector.broadcast %cst_26 : f32 to vector<4x32xf32>
    %51 = arith.addf %50, %49 : vector<4x32xf32>
    %52 = arith.divf %50, %51 : vector<4x32xf32>
    %53 = vector.broadcast %9 : vector<1x32xf32> to vector<4x32xf32>
    %54 = arith.mulf %45, %53 : vector<4x32xf32>
    %c0_27 = arith.constant 0 : index
    %c0_28 = arith.constant 0 : index
    %55 = vector.load %arg10[%c0_27, %c0_28] : memref<8x32xf32, #tpu.memory_space<vmem>>, vector<4x32xf32>
    tpu.vector_store %arg10[%c0_27, %c0_28], %54 {strides = array<i32>} : memref<8x32xf32, #tpu.memory_space<vmem>>, vector<4x32xf32>,
    %56 = vector.broadcast %11 : vector<1x32xf32> to vector<4x32xf32>
    %57 = arith.mulf %52, %56 : vector<4x32xf32>
    %c0_29 = arith.constant 0 : index
    %c0_30 = arith.constant 0 : index
    %58 = vector.load %arg11[%c0_29, %c0_30] : memref<8x32xf32, #tpu.memory_space<vmem>>, vector<4x32xf32>
    tpu.vector_store %arg11[%c0_29, %c0_30], %57 {strides = array<i32>} : memref<8x32xf32, #tpu.memory_space<vmem>>, vector<4x32xf32>,
    %59 = vector.extract_strided_slice %14 {offsets = [4, 0], sizes = [4, 32], strides = [1, 1]} : vector<8x32xf32> to vector<4x32xf32>
    %cst_31 = arith.constant dense<0.000000e+00> : vector<8x32xf32>
    %60 = tpu.matmul %24, %59, %cst_31 {dimension_numbers = #tpu.dot_dimension_numbers<[1], [0], [0], [1], [0, 0, 1, 1], [], []>} : vector<8x4xf32>, vector<4x32xf32>, vector<8x32xf32> -> vector<8x32xf32>
    %61 = arith.addf %60, %17 : vector<8x32xf32>
    %cst_32 = arith.constant 3.000000e+00 : f32
    %62 = vector.broadcast %cst_32 : f32 to vector<8x32xf32>
    %63 = arith.addf %61, %62 : vector<8x32xf32>
    %cst_33 = arith.constant 0.000000e+00 : f32
    %cst_34 = arith.constant 6.000000e+00 : f32
    %64 = vector.broadcast %cst_33 : f32 to vector<8x32xf32>
    %65 = arith.maximumf %64, %63 : vector<8x32xf32>
    %66 = vector.broadcast %cst_34 : f32 to vector<8x32xf32>
    %67 = arith.minimumf %66, %65 : vector<8x32xf32>
    %cst_35 = arith.constant 0.166666672 : f32
    %68 = vector.broadcast %cst_35 : f32 to vector<8x32xf32>
    %69 = arith.mulf %67, %68 : vector<8x32xf32>
    %70 = arith.mulf %61, %69 : vector<8x32xf32>
    %cst_36 = arith.constant dense<0.000000e+00> : vector<4x32xf32>
    %71 = tpu.matmul %25, %70, %cst_36 {dimension_numbers = #tpu.dot_dimension_numbers<[1], [0], [0], [1], [0, 0, 1, 1], [], []>} : vector<4x8xf32>, vector<8x32xf32>, vector<4x32xf32> -> vector<4x32xf32>
    %72 = arith.addf %71, %20 : vector<4x32xf32>
    %73 = arith.negf %72 : vector<4x32xf32>
    %74 = math.exp %73 : vector<4x32xf32>
    %cst_37 = arith.constant 1.000000e+00 : f32
    %75 = vector.broadcast %cst_37 : f32 to vector<4x32xf32>
    %76 = arith.addf %75, %74 : vector<4x32xf32>
    %77 = arith.divf %75, %76 : vector<4x32xf32>
    %cst_38 = arith.constant dense<0.000000e+00> : vector<4x32xf32>
    %78 = tpu.matmul %26, %70, %cst_38 {dimension_numbers = #tpu.dot_dimension_numbers<[1], [0], [0], [1], [0, 0, 1, 1], [], []>} : vector<4x8xf32>, vector<8x32xf32>, vector<4x32xf32> -> vector<4x32xf32>
    %79 = arith.addf %78, %23 : vector<4x32xf32>
    %80 = arith.negf %79 : vector<4x32xf32>
    %81 = math.exp %80 : vector<4x32xf32>
    %cst_39 = arith.constant 1.000000e+00 : f32
    %82 = vector.broadcast %cst_39 : f32 to vector<4x32xf32>
    %83 = arith.addf %82, %81 : vector<4x32xf32>
    %84 = arith.divf %82, %83 : vector<4x32xf32>
    %85 = vector.broadcast %9 : vector<1x32xf32> to vector<4x32xf32>
    %86 = arith.mulf %77, %85 : vector<4x32xf32>
    %c4 = arith.constant 4 : index
    %c0_40 = arith.constant 0 : index
    %87 = vector.load %arg10[%c4, %c0_40] : memref<8x32xf32, #tpu.memory_space<vmem>>, vector<4x32xf32>
    tpu.vector_store %arg10[%c4, %c0_40], %86 {strides = array<i32>} : memref<8x32xf32, #tpu.memory_space<vmem>>, vector<4x32xf32>,
    %88 = vector.broadcast %11 : vector<1x32xf32> to vector<4x32xf32>
    %89 = arith.mulf %84, %88 : vector<4x32xf32>
    %c4_41 = arith.constant 4 : index
    %c0_42 = arith.constant 0 : index
    %90 = vector.load %arg11[%c4_41, %c0_42] : memref<8x32xf32, #tpu.memory_space<vmem>>, vector<4x32xf32>
    tpu.vector_store %arg11[%c4_41, %c0_42], %89 {strides = array<i32>} : memref<8x32xf32, #tpu.memory_space<vmem>>, vector<4x32xf32>,
    %c0_43 = arith.constant 0 : index
    %c0_44 = arith.constant 0 : index
    %91 = vector.load %arg10[%c0_43, %c0_44] : memref<8x32xf32, #tpu.memory_space<vmem>>, vector<8x32xf32>
    %cst_45 = arith.constant dense<0.000000e+00> : vector<8x256xf32>
    %92 = tpu.matmul %91, %1, %cst_45 {dimension_numbers = #tpu.dot_dimension_numbers<[1], [0], [0], [1], [0, 0, 1, 1], [], []>} : vector<8x32xf32>, vector<32x256xf32>, vector<8x256xf32> -> vector<8x256xf32>
    %c0_46 = arith.constant 0 : index
    %c0_47 = arith.constant 0 : index
    %93 = vector.load %arg11[%c0_46, %c0_47] : memref<8x32xf32, #tpu.memory_space<vmem>>, vector<8x32xf32>
    %cst_48 = arith.constant dense<0.000000e+00> : vector<8x256xf32>
    %94 = tpu.matmul %93, %1, %cst_48 {dimension_numbers = #tpu.dot_dimension_numbers<[1], [0], [0], [1], [0, 0, 1, 1], [], []>} : vector<8x32xf32>, vector<32x256xf32>, vector<8x256xf32> -> vector<8x256xf32>
    %95 = arith.mulf %0, %92 : vector<8x256xf32>
    %96 = arith.mulf %95, %94 : vector<8x256xf32>
    %c0_49 = arith.constant 0 : index
    %c0_50 = arith.constant 0 : index
    %97 = vector.load %arg9[%c0_49, %c0_50] : memref<8x256xf32, #tpu.memory_space<vmem>>, vector<8x256xf32>
    tpu.vector_store %arg9[%c0_49, %c0_50], %96 {strides = array<i32>} : memref<8x256xf32, #tpu.memory_space<vmem>>, vector<8x256xf32>,
    return
  }
  func.func @transform_0(%arg0: i32) -> (i32, i32) {
    %c0_i32 = arith.constant 0 : i32
    %c0_i32_0 = arith.constant 0 : i32
    return %arg0, %c0_i32 : i32, i32
  }
  func.func @transform_1(%arg0: i32) -> (i32, i32) {
    %c0_i32 = arith.constant 0 : i32
    %c0_i32_0 = arith.constant 0 : i32
    %c0_i32_1 = arith.constant 0 : i32
    return %c0_i32, %c0_i32_0 : i32, i32
  }
  func.func @transform_2(%arg0: i32) -> (i32, i32) {
    %c0_i32 = arith.constant 0 : i32
    %c0_i32_0 = arith.constant 0 : i32
    %c0_i32_1 = arith.constant 0 : i32
    return %c0_i32, %c0_i32_0 : i32, i32
  }
  func.func @transform_3(%arg0: i32) -> (i32, i32) {
    %c0_i32 = arith.constant 0 : i32
    %c0_i32_0 = arith.constant 0 : i32
    %c0_i32_1 = arith.constant 0 : i32
    return %c0_i32, %c0_i32_0 : i32, i32
  }
  func.func @transform_4(%arg0: i32) -> (i32, i32) {
    %c0_i32 = arith.constant 0 : i32
    %c0_i32_0 = arith.constant 0 : i32
    %c0_i32_1 = arith.constant 0 : i32
    return %c0_i32, %c0_i32_0 : i32, i32
  }
  func.func @transform_5(%arg0: i32) -> (i32, i32) {
    %c0_i32 = arith.constant 0 : i32
    %c0_i32_0 = arith.constant 0 : i32
    %c0_i32_1 = arith.constant 0 : i32
    return %c0_i32, %c0_i32_0 : i32, i32
  }
  func.func @transform_6(%arg0: i32) -> (i32, i32) {
    %c0_i32 = arith.constant 0 : i32
    %c0_i32_0 = arith.constant 0 : i32
    %c0_i32_1 = arith.constant 0 : i32
    return %c0_i32, %c0_i32_0 : i32, i32
  }
  func.func @transform_7(%arg0: i32) -> (i32, i32) {
    %c0_i32 = arith.constant 0 : i32
    %c0_i32_0 = arith.constant 0 : i32
    %c0_i32_1 = arith.constant 0 : i32
    return %c0_i32, %c0_i32_0 : i32, i32
  }
  func.func @transform_8(%arg0: i32) -> (i32, i32) {
    %c0_i32 = arith.constant 0 : i32
    %c0_i32_0 = arith.constant 0 : i32
    return %arg0, %c0_i32 : i32, i32
  }
}

</mosaic_0001>

<llo_original>
// kernel: tpu_custom_call.1
$region0: #{tpu_custom_call.1}
  #allocation0 [shape = 'u32[]', space=smem, size = 0x4, offset = 0x4, fixed_abs, tag = 'smem constant byte address 0x4 - core index']
  #allocation1 [shape = 'u32[72,128]{1,0:T(1,128)}', space=vmem, size = 0x9000, scoped, tag = 'internal scratch']
  #allocation2 [shape = 'f32[8,32]{1,0:T(8,128)}', space=vmem, size = 0x1000, scoped, tag = 'scratch operand']
  #allocation3 [shape = 'f32[8,32]{1,0:T(8,128)}', space=vmem, size = 0x1000, scoped, tag = 'scratch operand']
  %s0 = inlined_call_operand.vmem [shape: f32[8,256], index: 0, kind: input, shape index: {}]
  %s1 = inlined_call_operand.hbm [shape: f32[32,256], index: 1, kind: input, shape index: {}]
  %s2 = inlined_call_operand.vmem [shape: f32[8,4], index: 2, kind: input, shape index: {}]
  %s3 = inlined_call_operand.vmem [shape: f32[8,1], index: 3, kind: input, shape index: {}]
  %s4 = inlined_call_operand.vmem [shape: f32[4,8], index: 4, kind: input, shape index: {}]
  %s5 = inlined_call_operand.vmem [shape: f32[4,1], index: 5, kind: input, shape index: {}]
  %s6 = inlined_call_operand.vmem [shape: f32[4,8], index: 6, kind: input, shape index: {}]
  %s7 = inlined_call_operand.vmem [shape: f32[4,1], index: 7, kind: input, shape index: {}]
  %s8 = inlined_call_operand.hbm [shape: f32[8,256], index: 8, kind: output, shape index: {}]
  %s9 = sld [smem:[#allocation0]]
  $region46: #{tpu_custom_call.1} parent=0
    _
  %s11 = ssub.s32 1, %s9
  %s12 = scalar_select 0, %s11, %s9
  $region1: #{tpu_custom_call.1} parent=0
    #allocation4 [shape = 'u8[32768]{0}', space=vmem, size = 0x8000, scoped, tag = 'input window, operand 1, single buffered']
    #allocation5 [shape = 's32[1]{0}', space=sflag, size = 0x4, scoped, tag = 'scoped memory for tpu_custom_call.1']
    #allocation6 [shape = 's32[1]{0}', space=sflag, size = 0x4, scoped, tag = 'scoped memory for tpu_custom_call.1']
    #allocation7 [shape = 'u8[8192]{0}', space=vmem, size = 0x2000, scoped, tag = 'output window, operand 0, single buffered']
    %13 = vsyncpa [#allocation5], 0
    %14 = vsyncpa [#allocation6], 0
    // Predicated region
    $region2: #{tpu_custom_call.1} parent=1 // pred_check
      _
    $region3: #{tpu_custom_call.1} parent=1 // pred_check_branch
      %16 = sbr.rel (0) target = $region5
    $region4: #{tpu_custom_call.1} parent=1 // pred_region
      _
    $region5: #{tpu_custom_call.1} parent=1 // pred_fallthru
      _
    // Predicated region
    $region6: #{tpu_custom_call.1} parent=1 // pred_check
      _
    $region7: #{tpu_custom_call.1} parent=1 // pred_check_branch
      %18 = sbr.rel (0) target = $region9
    $region8: #{tpu_custom_call.1} parent=1 // pred_region
      %20 = vsyncadd [#allocation5], 0
      %s21 = sshll.u32 %s1, 4
      %s22 = int_to_ptr.hbm [resolvable:$true] %s21
      %s23 = sshll.u32 [#allocation4], 4
      %s24 = int_to_ptr.vmem [resolvable:$true] %s23
      %29 = dma.hbm_to_vmem [thread:$0]  %s22, 1024, %s24, [#allocation5], 256, 256, 16
    $region9: #{tpu_custom_call.1} parent=1 // pred_fallthru
      _
    // Predicated region
    $region10: #{tpu_custom_call.1} parent=1 // pred_check
      _
    $region11: #{tpu_custom_call.1} parent=1 // pred_check_branch
      %31 = sbr.rel (0) target = $region13
    $region12: #{tpu_custom_call.1} parent=1 // pred_region
      _
    $region13: #{tpu_custom_call.1} parent=1 // pred_fallthru
      _
    // Predicated region
    $region14: #{tpu_custom_call.1} parent=1 // pred_check
      _
    $region15: #{tpu_custom_call.1} parent=1 // pred_check_branch
      %33 = sbr.rel (0) target = $region17
    $region16: #{tpu_custom_call.1} parent=1 // pred_region
      _
    $region17: #{tpu_custom_call.1} parent=1 // pred_fallthru
      _
    // Predicated region
    $region18: #{tpu_custom_call.1} parent=1 // pred_check
      _
    $region19: #{tpu_custom_call.1} parent=1 // pred_check_branch
      %35 = sbr.rel (0) target = $region21
    $region20: #{tpu_custom_call.1} parent=1 // pred_region
      _
    $region21: #{tpu_custom_call.1} parent=1 // pred_fallthru
      _
    // Predicated region
    $region22: #{tpu_custom_call.1} parent=1 // pred_check
      _
    $region23: #{tpu_custom_call.1} parent=1 // pred_check_branch
      %37 = sbr.rel (0) target = $region25
    $region24: #{tpu_custom_call.1} parent=1 // pred_region
      _
    $region25: #{tpu_custom_call.1} parent=1 // pred_fallthru
      _
    // Predicated region
    $region26: #{tpu_custom_call.1} parent=1 // pred_check
      _
    $region27: #{tpu_custom_call.1} parent=1 // pred_check_branch
      %39 = sbr.rel (0) target = $region29
    $region28: #{tpu_custom_call.1} parent=1 // pred_region
      _
    $region29: #{tpu_custom_call.1} parent=1 // pred_fallthru
      _
    // Predicated region
    $region30: #{tpu_custom_call.1} parent=1 // pred_check
      _
    $region31: #{tpu_custom_call.1} parent=1 // pred_check_branch
      %41 = sbr.rel (0) target = $region33
    $region32: #{tpu_custom_call.1} parent=1 // pred_region
      _
    $region33: #{tpu_custom_call.1} parent=1 // pred_fallthru
      _
    // Predicated region
    $region34: #{tpu_custom_call.1} parent=1 // pred_check
      _
    $region35: #{tpu_custom_call.1} parent=1 // pred_check_branch
      %43 = sbr.rel (0) target = $region37
    $region36: #{tpu_custom_call.1} parent=1 // pred_region
      %45 = dma.done [#allocation5], 1024
    $region37: #{tpu_custom_call.1} parent=1 // pred_fallthru
      _
    %v46 = vld [vmem:[%s0] sm:$0xff]
    %v47 = vld [vmem:[%s0 + $0x8] sm:$0xff]
    %v48 = vld [vmem:[#allocation4] sm:$0xff]
    %v49 = vld [vmem:[#allocation4 + $0x8] sm:$0xff]
    %v50 = vld [vmem:[#allocation4 + $0x10] sm:$0xff]
    %v51 = vld [vmem:[#allocation4 + $0x18] sm:$0xff]
    %v52 = vld [vmem:[#allocation4 + $0x20] sm:$0xff]
    %v53 = vld [vmem:[#allocation4 + $0x28] sm:$0xff]
    %v54 = vld [vmem:[#allocation4 + $0x30] sm:$0xff]
    %v55 = vld [vmem:[#allocation4 + $0x38] sm:$0xff]
    %v56 = vlaneseq
    %v57 = vand.u32 %v56, 127
    %vm58 = vcmp.lt.s32.totalorder %v57, 16
    %v59 = vsel %vm58, 1, 0
    %v60 = vcvt.s32.f32 %v59
    %v61 = vsub.f32 1.0, %v60
    %62 = vmatpush.xpose.msra.mxu0 0.0
    %63 = vmatpush.xpose.msra.mxu0 0.0
    %64 = vmatpush.xpose.msra.mxu0 0.0
    %65 = vmatpush.xpose.msra.mxu0 0.0
    %66 = vmatpush.xpose.msra.mxu0 0.0
    %67 = vmatpush.xpose.msra.mxu0 0.0
    %68 = vmatpush.xpose.msra.mxu0 0.0
    %69 = vmatpush.xpose.msra.mxu0 0.0
    %70 = vmatpush.xpose.msra.mxu0 0.0
    %71 = vmatpush.xpose.msra.mxu0 0.0
    %72 = vmatpush.xpose.msra.mxu0 0.0
    %73 = vmatpush.xpose.msra.mxu0 0.0
    %74 = vmatpush.xpose.msra.mxu0 %v54
    %75 = vmatpush.xpose.msra.mxu0 %v52
    %76 = vmatpush.xpose.msra.mxu0 %v50
    %77 = vmatpush.xpose.msra.mxu0 %v48
    %78 = vmatmul.f32.gmra.mxu0 %v46
    %v79 = vpop.f32.mrf.mxu0
    %v80 = vadd.f32 0.0, %v79
    %81 = vdwg.mxu0
    %82 = vmatpush.xpose.msra.mxu0 0.0
    %83 = vmatpush.xpose.msra.mxu0 0.0
    %84 = vmatpush.xpose.msra.mxu0 0.0
    %85 = vmatpush.xpose.msra.mxu0 0.0
    %86 = vmatpush.xpose.msra.mxu0 0.0
    %87 = vmatpush.xpose.msra.mxu0 0.0
    %88 = vmatpush.xpose.msra.mxu0 0.0
    %89 = vmatpush.xpose.msra.mxu0 0.0
    %90 = vmatpush.xpose.msra.mxu0 0.0
    %91 = vmatpush.xpose.msra.mxu0 0.0
    %92 = vmatpush.xpose.msra.mxu0 0.0
    %93 = vmatpush.xpose.msra.mxu0 0.0
    %94 = vmatpush.xpose.msra.mxu0 %v55
    %95 = vmatpush.xpose.msra.mxu0 %v53
    %96 = vmatpush.xpose.msra.mxu0 %v51
    %97 = vmatpush.xpose.msra.mxu0 %v49
    %98 = vmatmul.f32.gmra.mxu0 %v47
    %v99 = vpop.f32.mrf.mxu0
    %v100 = vadd.f32 %v80, %v99
    %101 = vdwg.mxu0
    %v102 = vmul.f32 %v100, 0.0625
    %v103 = vld [vmem:[%s3] sm:$0xff]
    %105 = vset.pattern.permute.xlu0 0
    %106 = vperm.xlu0 %105, %v103
    %v107 = vpop.permute.xlu0 %106
    %v109 = vld [vmem:[%s5] sm:$0xf]
    %111 = vset.pattern.permute.xlu0 0
    %112 = vperm.xlu0 %111, %v109
    %v113 = vpop.permute.xlu0 %112
    %v115 = vld [vmem:[%s7] sm:$0xf]
    %117 = vset.pattern.permute.xlu0 0
    %118 = vperm.xlu0 %117, %v115
    %v119 = vpop.permute.xlu0 %118
    %v121 = vld [vmem:[%s2] sm:$0xff]
    %v122 = vld [vmem:[%s4] sm:$0xf]
    %v123 = vld [vmem:[%s6] sm:$0xf]
    %vm124 = vcmask 31744
    %v126 = vsel %vm124, %v121, 0
    %vm128 = vcmask 1043456
    %v130 = vsel %vm128, %v102, 0
    %132 = vmatpush.msra.mxu0 0.0
    %133 = vmatpush.msra.mxu0 0.0
    %134 = vmatpush.msra.mxu0 0.0
    %135 = vmatpush.msra.mxu0 0.0
    %136 = vmatpush.msra.mxu0 0.0
    %137 = vmatpush.msra.mxu0 0.0
    %138 = vmatpush.msra.mxu0 0.0
    %139 = vmatpush.msra.mxu0 0.0
    %140 = vmatpush.msra.mxu0 0.0
    %141 = vmatpush.msra.mxu0 0.0
    %142 = vmatpush.msra.mxu0 0.0
    %143 = vmatpush.msra.mxu0 0.0
    %144 = vmatpush.msra.mxu0 0.0
    %145 = vmatpush.msra.mxu0 0.0
    %146 = vmatpush.msra.mxu0 0.0
    %147 = vmatpush.msra.mxu0 %v130
    %148 = vmatmul.f32.gmra.mxu0 %v126
    %v149 = vpop.f32.mrf.mxu0
    %v150 = vadd.f32 %v107, %v149
    %151 = vdwg.mxu0
    %v152 = vadd.f32 %v150, 3.0
    %v153 = vmax.f32 %v152, 0.0
    %v154 = vmin.f32 %v153, 6.0
    %v155 = vmul.f32 %v154, 0.16666667
    %v156 = vmul.f32 %v150, %v155
    %vm157 = vcmask 64512
    %v159 = vsel %vm157, %v122, 0
    %161 = vmatpush.msra.mxu0 0.0
    %162 = vmatpush.msra.mxu0 0.0
    %163 = vmatpush.msra.mxu0 0.0
    %164 = vmatpush.msra.mxu0 0.0
    %165 = vmatpush.msra.mxu0 0.0
    %166 = vmatpush.msra.mxu0 0.0
    %167 = vmatpush.msra.mxu0 0.0
    %168 = vmatpush.msra.mxu0 0.0
    %169 = vmatpush.msra.mxu0 0.0
    %170 = vmatpush.msra.mxu0 0.0
    %171 = vmatpush.msra.mxu0 0.0
    %172 = vmatpush.msra.mxu0 0.0
    %173 = vmatpush.msra.mxu0 0.0
    %174 = vmatpush.msra.mxu0 0.0
    %175 = vmatpush.msra.mxu0 0.0
    %176 = vmatpush.msra.mxu0 %v156
    %177 = vmatmul.f32.gmra.mxu0 %v159
    %v178 = vpop.f32.mrf.mxu0
    %v179 = vadd.f32 %v113, %v178
    %180 = vdwg.mxu0
    %v181 = vxor.u32 %v179, 2147483648
    %v182 = vmul.f32 %v181, 1.442695
    %v183 = vpow.pop %v182
    %v184 = vadd.f32 %v183, 1.0
    %v185 = vrcp.pop %v184
    %v186 = vmul.f32 %v184, %v185
    %v187 = vsub.f32 1.0, %v186
    %v188 = vmul.f32 %v185, %v187
    %v189 = vadd.f32 %v185, %v188
    %vm190 = vweird.f32 %v184
    %vm191 = vweird.f32 %v185
    %vm192 = vmor %vm190, %vm191
    %v193 = vsel %vm192, %v185, %v189
    %v194 = vand.u32 2147483647, %v184
    %vm195 = vcmp.eq.f32.partialorder %v194, 8.507059e+37
    %v196 = vand.u32 %v184, 2147483648
    %v197 = vor.u32 1.1754944e-38, %v196
    %v198 = vsel %vm195, %v197, %v193
    %v199 = vmul.f32 1.0, %v198
    %v201 = vsel %vm157, %v123, 0
    %203 = vmatpush.msra.mxu0 0.0
    %204 = vmatpush.msra.mxu0 0.0
    %205 = vmatpush.msra.mxu0 0.0
    %206 = vmatpush.msra.mxu0 0.0
    %207 = vmatpush.msra.mxu0 0.0
    %208 = vmatpush.msra.mxu0 0.0
    %209 = vmatpush.msra.mxu0 0.0
    %210 = vmatpush.msra.mxu0 0.0
    %211 = vmatpush.msra.mxu0 0.0
    %212 = vmatpush.msra.mxu0 0.0
    %213 = vmatpush.msra.mxu0 0.0
    %214 = vmatpush.msra.mxu0 0.0
    %215 = vmatpush.msra.mxu0 0.0
    %216 = vmatpush.msra.mxu0 0.0
    %217 = vmatpush.msra.mxu0 0.0
    %218 = vmatpush.msra.mxu0 %v156
    %219 = vmatmul.f32.gmra.mxu0 %v201
    %v220 = vpop.f32.mrf.mxu0
    %v221 = vadd.f32 %v119, %v220
    %222 = vdwg.mxu0
    %v223 = vxor.u32 %v221, 2147483648
    %v224 = vmul.f32 %v223, 1.442695
    %v225 = vpow.pop %v224
    %v226 = vadd.f32 %v225, 1.0
    %v227 = vrcp.pop %v226
    %v228 = vmul.f32 %v226, %v227
    %v229 = vsub.f32 1.0, %v228
    %v230 = vmul.f32 %v227, %v229
    %v231 = vadd.f32 %v227, %v230
    %vm232 = vweird.f32 %v226
    %vm233 = vweird.f32 %v227
    %vm234 = vmor %vm232, %vm233
    %v235 = vsel %vm234, %v227, %v231
    %v236 = vand.u32 2147483647, %v226
    %vm237 = vcmp.eq.f32.partialorder %v236, 8.507059e+37
    %v238 = vand.u32 %v226, 2147483648
    %v239 = vor.u32 1.1754944e-38, %v238
    %v240 = vsel %vm237, %v239, %v235
    %v241 = vmul.f32 1.0, %v240
    %v242 = vmul.f32 %v199, %v60
    %vm243 = vcmask 257024
    %244 = vst.msk [vmem:[#allocation2] sm:$0xf] %vm243, %v242
    %v245 = vmul.f32 %v241, %v61
    %246 = vst.msk [vmem:[#allocation3] sm:$0xf] %vm243, %v245
    %v247 = vrot.slane %v102, 4
    %v248 = vsel %vm128, %v247, 0
    %250 = vmatpush.msra.mxu0 0.0
    %251 = vmatpush.msra.mxu0 0.0
    %252 = vmatpush.msra.mxu0 0.0
    %253 = vmatpush.msra.mxu0 0.0
    %254 = vmatpush.msra.mxu0 0.0
    %255 = vmatpush.msra.mxu0 0.0
    %256 = vmatpush.msra.mxu0 0.0
    %257 = vmatpush.msra.mxu0 0.0
    %258 = vmatpush.msra.mxu0 0.0
    %259 = vmatpush.msra.mxu0 0.0
    %260 = vmatpush.msra.mxu0 0.0
    %261 = vmatpush.msra.mxu0 0.0
    %262 = vmatpush.msra.mxu0 0.0
    %263 = vmatpush.msra.mxu0 0.0
    %264 = vmatpush.msra.mxu0 0.0
    %265 = vmatpush.msra.mxu0 %v248
    %266 = vmatmul.f32.gmra.mxu0 %v126
    %v267 = vpop.f32.mrf.mxu0
    %v268 = vadd.f32 %v107, %v267
    %269 = vdwg.mxu0
    %v270 = vadd.f32 %v268, 3.0
    %v271 = vmax.f32 %v270, 0.0
    %v272 = vmin.f32 %v271, 6.0
    %v273 = vmul.f32 %v272, 0.16666667
    %v274 = vmul.f32 %v268, %v273
    %275 = vmatpush.msra.mxu0 0.0
    %276 = vmatpush.msra.mxu0 0.0
    %277 = vmatpush.msra.mxu0 0.0
    %278 = vmatpush.msra.mxu0 0.0
    %279 = vmatpush.msra.mxu0 0.0
    %280 = vmatpush.msra.mxu0 0.0
    %281 = vmatpush.msra.mxu0 0.0
    %282 = vmatpush.msra.mxu0 0.0
    %283 = vmatpush.msra.mxu0 0.0
    %284 = vmatpush.msra.mxu0 0.0
    %285 = vmatpush.msra.mxu0 0.0
    %286 = vmatpush.msra.mxu0 0.0
    %287 = vmatpush.msra.mxu0 0.0
    %288 = vmatpush.msra.mxu0 0.0
    %289 = vmatpush.msra.mxu0 0.0
    %290 = vmatpush.msra.mxu0 %v274
    %291 = vmatmul.f32.gmra.mxu0 %v159
    %v292 = vpop.f32.mrf.mxu0
    %v293 = vadd.f32 %v113, %v292
    %294 = vdwg.mxu0
    %v295 = vxor.u32 %v293, 2147483648
    %v296 = vmul.f32 %v295, 1.442695
    %v297 = vpow.pop %v296
    %v298 = vadd.f32 %v297, 1.0
    %v299 = vrcp.pop %v298
    %v300 = vmul.f32 %v298, %v299
    %v301 = vsub.f32 1.0, %v300
    %v302 = vmul.f32 %v299, %v301
    %v303 = vadd.f32 %v299, %v302
    %vm304 = vweird.f32 %v298
    %vm305 = vweird.f32 %v299
    %vm306 = vmor %vm304, %vm305
    %v307 = vsel %vm306, %v299, %v303
    %v308 = vand.u32 2147483647, %v298
    %vm309 = vcmp.eq.f32.partialorder %v308, 8.507059e+37
    %v310 = vand.u32 %v298, 2147483648
    %v311 = vor.u32 1.1754944e-38, %v310
    %v312 = vsel %vm309, %v311, %v307
    %v313 = vmul.f32 1.0, %v312
    %314 = vmatpush.msra.mxu0 0.0
    %315 = vmatpush.msra.mxu0 0.0
    %316 = vmatpush.msra.mxu0 0.0
    %317 = vmatpush.msra.mxu0 0.0
    %318 = vmatpush.msra.mxu0 0.0
    %319 = vmatpush.msra.mxu0 0.0
    %320 = vmatpush.msra.mxu0 0.0
    %321 = vmatpush.msra.mxu0 0.0
    %322 = vmatpush.msra.mxu0 0.0
    %323 = vmatpush.msra.mxu0 0.0
    %324 = vmatpush.msra.mxu0 0.0
    %325 = vmatpush.msra.mxu0 0.0
    %326 = vmatpush.msra.mxu0 0.0
    %327 = vmatpush.msra.mxu0 0.0
    %328 = vmatpush.msra.mxu0 0.0
    %329 = vmatpush.msra.mxu0 %v274
    %330 = vmatmul.f32.gmra.mxu0 %v201
    %v331 = vpop.f32.mrf.mxu0
    %v332 = vadd.f32 %v119, %v331
    %333 = vdwg.mxu0
    %v334 = vxor.u32 %v332, 2147483648
    %v335 = vmul.f32 %v334, 1.442695
    %v336 = vpow.pop %v335
    %v337 = vadd.f32 %v336, 1.0
    %v338 = vrcp.pop %v337
    %v339 = vmul.f32 %v337, %v338
    %v340 = vsub.f32 1.0, %v339
    %v341 = vmul.f32 %v338, %v340
    %v342 = vadd.f32 %v338, %v341
    %vm343 = vweird.f32 %v337
    %vm344 = vweird.f32 %v338
    %vm345 = vmor %vm343, %vm344
    %v346 = vsel %vm345, %v338, %v342
    %v347 = vand.u32 2147483647, %v337
    %vm348 = vcmp.eq.f32.partialorder %v347, 8.507059e+37
    %v349 = vand.u32 %v337, 2147483648
    %v350 = vor.u32 1.1754944e-38, %v349
    %v351 = vsel %vm348, %v350, %v346
    %v352 = vmul.f32 1.0, %v351
    %v353 = vmul.f32 %v313, %v60
    %354 = vst.msk [vmem:[#allocation2 + $0x4] sm:$0xf] %vm243, %v353
    %v355 = vmul.f32 %v352, %v61
    %356 = vst.msk [vmem:[#allocation3 + $0x4] sm:$0xf] %vm243, %v355
    %v357 = vld [vmem:[#allocation2] sm:$0xff]
    %vm358 = vcmask 261120
    %v360 = vsel %vm358, %v357, 0
    %362 = vmatpush.msra.mxu0 0.0
    %363 = vmatpush.msra.mxu0 0.0
    %364 = vmatpush.msra.mxu0 0.0
    %365 = vmatpush.msra.mxu0 0.0
    %366 = vmatpush.msra.mxu0 0.0
    %367 = vmatpush.msra.mxu0 0.0
    %368 = vmatpush.msra.mxu0 0.0
    %369 = vmatpush.msra.mxu0 0.0
    %370 = vmatpush.msra.mxu0 0.0
    %371 = vmatpush.msra.mxu0 0.0
    %372 = vmatpush.msra.mxu0 0.0
    %373 = vmatpush.msra.mxu0 0.0
    %374 = vmatpush.msra.mxu0 %v54
    %375 = vmatpush.msra.mxu0 %v52
    %376 = vmatpush.msra.mxu0 %v50
    %377 = vmatpush.msra.mxu0 %v48
    %378 = vmatmul.f32.gmra.mxu0 %v360
    %v379 = vpop.f32.mrf.mxu0
    %v380 = vadd.f32 0.0, %v379
    %381 = vdwg.mxu0
    %382 = vmatpush.msra.mxu0 0.0
    %383 = vmatpush.msra.mxu0 0.0
    %384 = vmatpush.msra.mxu0 0.0
    %385 = vmatpush.msra.mxu0 0.0
    %386 = vmatpush.msra.mxu0 0.0
    %387 = vmatpush.msra.mxu0 0.0
    %388 = vmatpush.msra.mxu0 0.0
    %389 = vmatpush.msra.mxu0 0.0
    %390 = vmatpush.msra.mxu0 0.0
    %391 = vmatpush.msra.mxu0 0.0
    %392 = vmatpush.msra.mxu0 0.0
    %393 = vmatpush.msra.mxu0 0.0
    %394 = vmatpush.msra.mxu0 %v55
    %395 = vmatpush.msra.mxu0 %v53
    %396 = vmatpush.msra.mxu0 %v51
    %397 = vmatpush.msra.mxu0 %v49
    %398 = vmatmul.f32.gmra.mxu0 %v360
    %v399 = vpop.f32.mrf.mxu0
    %v400 = vadd.f32 0.0, %v399
    %401 = vdwg.mxu0
    %v402 = vld [vmem:[#allocation3] sm:$0xff]
    %v404 = vsel %vm358, %v402, 0
    %406 = vmatpush.msra.mxu0 0.0
    %407 = vmatpush.msra.mxu0 0.0
    %408 = vmatpush.msra.mxu0 0.0
    %409 = vmatpush.msra.mxu0 0.0
    %410 = vmatpush.msra.mxu0 0.0
    %411 = vmatpush.msra.mxu0 0.0
    %412 = vmatpush.msra.mxu0 0.0
    %413 = vmatpush.msra.mxu0 0.0
    %414 = vmatpush.msra.mxu0 0.0
    %415 = vmatpush.msra.mxu0 0.0
    %416 = vmatpush.msra.mxu0 0.0
    %417 = vmatpush.msra.mxu0 0.0
    %418 = vmatpush.msra.mxu0 %v54
    %419 = vmatpush.msra.mxu0 %v52
    %420 = vmatpush.msra.mxu0 %v50
    %421 = vmatpush.msra.mxu0 %v48
    %422 = vmatmul.f32.gmra.mxu0 %v404
    %v423 = vpop.f32.mrf.mxu0
    %v424 = vadd.f32 0.0, %v423
    %425 = vdwg.mxu0
    %426 = vmatpush.msra.mxu0 0.0
    %427 = vmatpush.msra.mxu0 0.0
    %428 = vmatpush.msra.mxu0 0.0
    %429 = vmatpush.msra.mxu0 0.0
    %430 = vmatpush.msra.mxu0 0.0
    %431 = vmatpush.msra.mxu0 0.0
    %432 = vmatpush.msra.mxu0 0.0
    %433 = vmatpush.msra.mxu0 0.0
    %434 = vmatpush.msra.mxu0 0.0
    %435 = vmatpush.msra.mxu0 0.0
    %436 = vmatpush.msra.mxu0 0.0
    %437 = vmatpush.msra.mxu0 0.0
    %438 = vmatpush.msra.mxu0 %v55
    %439 = vmatpush.msra.mxu0 %v53
    %440 = vmatpush.msra.mxu0 %v51
    %441 = vmatpush.msra.mxu0 %v49
    %442 = vmatmul.f32.gmra.mxu0 %v404
    %v443 = vpop.f32.mrf.mxu0
    %v444 = vadd.f32 0.0, %v443
    %445 = vdwg.mxu0
    %v446 = vmul.f32 %v46, %v380
    %v447 = vmul.f32 %v47, %v400
    %v448 = vmul.f32 %v446, %v424
    %v449 = vmul.f32 %v447, %v444
    %450 = vst [vmem:[#allocation7] sm:$0xff] %v448
    %451 = vst [vmem:[#allocation7 + $0x8] sm:$0xff] %v449
    // Predicated region
    $region38: #{tpu_custom_call.1} parent=1 // pred_check
      _
    $region39: #{tpu_custom_call.1} parent=1 // pred_check_branch
      %453 = sbr.rel (0) target = $region41
    $region40: #{tpu_custom_call.1} parent=1 // pred_region
      %455 = vsyncadd [#allocation6], 0
      %s457 = sshll.u32 [#allocation7], 4
      %s458 = int_to_ptr.vmem [resolvable:$true] %s457
      %s459 = sshll.u32 %s8, 4
      %s460 = int_to_ptr.hbm [resolvable:$true] %s459
      %462 = dma.vmem_to_hbm [thread:$0]  %s458, 256, %s460, [#allocation6]
    $region41: #{tpu_custom_call.1} parent=1 // pred_fallthru
      _
    // Predicated region
    $region42: #{tpu_custom_call.1} parent=1 // pred_check
      _
    $region43: #{tpu_custom_call.1} parent=1 // pred_check_branch
      %464 = sbr.rel (0) target = $region45
    $region44: #{tpu_custom_call.1} parent=1 // pred_region
      %466 = dma.done [#allocation6], 256
    $region45: #{tpu_custom_call.1} parent=1 // pred_fallthru
      _
    %467 = vsyncpa [#allocation5], 1
    %468 = vsyncpa [#allocation6], 1

</llo_original>
